<compile_context>
chip_gen: v6e
topology: v6e:2x2x1
jax: 0.10.0
libtpu: 0.0.40
codegen_flags: <defaults>
</compile_context>

<pallas_src>
import jax
import jax.numpy as jnp
from jax import lax
from jax.experimental import pallas as pl
from jax.experimental.pallas import tpu as pltpu

IN_FEATURES = 128
OUT_FEATURES = 768


def linear_kernel(x_ref, w_ref, b_ref, o_ref):
    # x_ref: (tm, K), w_ref: (N, K) PyTorch layout, b_ref: (1, N), o_ref: (tm, N)
    acc = lax.dot_general(
        x_ref[...],
        w_ref[...],
        dimension_numbers=(((1,), (1,)), ((), ())),  # contract K of both (trans_b)
        preferred_element_type=jnp.float32,
    )
    o_ref[...] = (acc + b_ref[...]).astype(o_ref.dtype)


def _round_up(x, m):
    return ((x + m - 1) // m) * m


def pallas_linear(x, weight, bias, *, tm=1024):
    """x: (M, K) fp32, weight: (N, K) fp32 (PyTorch layout), bias: (N,) fp32."""
    M, K = x.shape
    N, K2 = weight.shape
    assert K == IN_FEATURES and K2 == IN_FEATURES and N == OUT_FEATURES

    # Large tile for big M (amortize per-step overhead, keep HBM streaming),
    # but never bigger than M rounded to a sublane multiple so tiny inputs
    # don't pad to 1024 rows.
    tm_eff = min(tm, _round_up(M, 8))
    M_pad = _round_up(M, tm_eff)
    if M_pad != M:
        x = jnp.pad(x, ((0, M_pad - M), (0, 0)))

    b2d = bias.reshape(1, N)
    grid = (M_pad // tm_eff,)

    cost = pl.CostEstimate(
        flops=2 * M_pad * K * N,
        transcendentals=0,
        bytes_accessed=4 * (M_pad * K + N * K + M_pad * N + N),
    )

    y = pl.pallas_call(
        linear_kernel,
        out_shape=jax.ShapeDtypeStruct((M_pad, N), x.dtype),
        grid_spec=pltpu.PrefetchScalarGridSpec(
            num_scalar_prefetch=0,
            grid=grid,
            in_specs=[
                pl.BlockSpec((tm_eff, K), lambda i: (i, 0)),  # x tile (streamed)
                pl.BlockSpec((N, K), lambda i: (0, 0)),       # full weight (resident)
                pl.BlockSpec((1, N), lambda i: (0, 0)),       # bias row (resident)
            ],
            out_specs=pl.BlockSpec((tm_eff, N), lambda i: (i, 0)),
        ),
        compiler_params=pltpu.CompilerParams(
            dimension_semantics=("parallel",),
            vmem_limit_bytes=32 * 1024 * 1024,
        ),
        cost_estimate=cost,
    )(x, weight, b2d)

    if M_pad != M:
        y = y[:M]
    return y


def model_linear_forward(img, weight, bias):
    """Equivalent of model_Linear.forward: nn.Linear(128, 768) on last dim.

    img:    (..., 128)
    weight: (768, 128)   (PyTorch convention: out_features x in_features)
    bias:   (768,)
    returns (..., 768)
    """
    lead_shape = img.shape[:-1]
    x2d = img.reshape(-1, IN_FEATURES)
    y2d = pallas_linear(x2d, weight, bias)
    return y2d.reshape(*lead_shape, OUT_FEATURES)


if __name__ == "__main__":
    key = jax.random.PRNGKey(0)
    k_img, k_w, k_b = jax.random.split(key, 3)

    # Small shapes consistent with the module: batch=2, seq=8, features=128.
    B, S = 2, 8
    img = jax.random.normal(k_img, (B, S, IN_FEATURES), dtype=jnp.float32)

    # Deterministic parameter init (mimics nn.Linear's U(-1/sqrt(fan_in), +)).
    bound = 1.0 / (IN_FEATURES ** 0.5)
    weight = jax.random.uniform(
        k_w, (OUT_FEATURES, IN_FEATURES), jnp.float32, -bound, bound
    )
    bias = jax.random.uniform(
        k_b, (OUT_FEATURES,), jnp.float32, -bound, bound
    )

    out = model_linear_forward(img, weight, bias)
    out = jax.block_until_ready(out)

    # Reference check against plain JAX (same math as torch nn.Linear).
    ref = img @ weight.T + bias
    assert out.shape == (B, S, OUT_FEATURES)
    assert jnp.allclose(out, ref, atol=1e-4, rtol=1e-4)

    # Also check a ragged-M shape exercises the padding path.
    img2 = jax.random.normal(k_img, (3, 7, IN_FEATURES), dtype=jnp.float32)
    out2 = jax.block_until_ready(model_linear_forward(img2, weight, bias))
    ref2 = img2 @ weight.T + bias
    assert out2.shape == (3, 7, OUT_FEATURES)
    assert jnp.allclose(out2, ref2, atol=1e-4, rtol=1e-4)

    print("KERNEL_OK")
</pallas_src>

<mosaic_0001>
module attributes {stable_mosaic.version = 11 : i64} {
  func.func @linear_kernel(%arg0: i32, %arg1: memref<16x128xf32, #tpu.memory_space<vmem>>, %arg2: memref<768x128xf32, #tpu.memory_space<vmem>>, %arg3: memref<1x768xf32, #tpu.memory_space<vmem>>, %arg4: memref<16x768xf32, #tpu.memory_space<vmem>>) attributes {dimension_semantics = [#tpu.dimension_semantics<parallel>], iteration_bounds = array<i64: 1>, scalar_prefetch = 0 : i64, scratch_operands = 0 : i64, tpu.core_type = #tpu.core_type<tc>, window_params = [{transform_indices = @transform_0, window_bounds = array<i64: 16, 128>}, {pipeline_mode = #tpu.pipeline_mode<synchronous>, transform_indices = @transform_1, window_bounds = array<i64: 768, 128>}, {pipeline_mode = #tpu.pipeline_mode<synchronous>, transform_indices = @transform_2, window_bounds = array<i64: 1, 768>}, {transform_indices = @transform_3, window_bounds = array<i64: 16, 768>}]} {
    %c0 = arith.constant 0 : index
    %c0_0 = arith.constant 0 : index
    %0 = vector.load %arg1[%c0, %c0_0] : memref<16x128xf32, #tpu.memory_space<vmem>>, vector<16x128xf32>
    %c0_1 = arith.constant 0 : index
    %c0_2 = arith.constant 0 : index
    %1 = vector.load %arg2[%c0_1, %c0_2] : memref<768x128xf32, #tpu.memory_space<vmem>>, vector<768x128xf32>
    %cst = arith.constant dense<0.000000e+00> : vector<16x768xf32>
    %2 = tpu.matmul %0, %1, %cst {dimension_numbers = #tpu.dot_dimension_numbers<[1], [1], [0], [0], [0, 0, 1, 0], [], []>} : vector<16x128xf32>, vector<768x128xf32>, vector<16x768xf32> -> vector<16x768xf32>
    %c0_3 = arith.constant 0 : index
    %c0_4 = arith.constant 0 : index
    %3 = vector.load %arg3[%c0_3, %c0_4] : memref<1x768xf32, #tpu.memory_space<vmem>>, vector<1x768xf32>
    %4 = vector.broadcast %3 : vector<1x768xf32> to vector<16x768xf32>
    %5 = arith.addf %2, %4 : vector<16x768xf32>
    %c0_5 = arith.constant 0 : index
    %c0_6 = arith.constant 0 : index
    %6 = vector.load %arg4[%c0_5, %c0_6] : memref<16x768xf32, #tpu.memory_space<vmem>>, vector<16x768xf32>
    tpu.vector_store %arg4[%c0_5, %c0_6], %5 {strides = array<i32>} : memref<16x768xf32, #tpu.memory_space<vmem>>, vector<16x768xf32>,
    return
  }
  func.func @transform_0(%arg0: i32) -> (i32, i32) {
    %c0_i32 = arith.constant 0 : i32
    %c0_i32_0 = arith.constant 0 : i32
    return %arg0, %c0_i32 : i32, i32
  }
  func.func @transform_1(%arg0: i32) -> (i32, i32) {
    %c0_i32 = arith.constant 0 : i32
    %c0_i32_0 = arith.constant 0 : i32
    %c0_i32_1 = arith.constant 0 : i32
    return %c0_i32, %c0_i32_0 : i32, i32
  }
  func.func @transform_2(%arg0: i32) -> (i32, i32) {
    %c0_i32 = arith.constant 0 : i32
    %c0_i32_0 = arith.constant 0 : i32
    %c0_i32_1 = arith.constant 0 : i32
    return %c0_i32, %c0_i32_0 : i32, i32
  }
  func.func @transform_3(%arg0: i32) -> (i32, i32) {
    %c0_i32 = arith.constant 0 : i32
    %c0_i32_0 = arith.constant 0 : i32
    return %arg0, %c0_i32 : i32, i32
  }
}

</mosaic_0001>

<llo_original>
// kernel: tpu_custom_call.1
$region0: #{tpu_custom_call.1}
  #allocation0 [shape = 'u32[]', space=smem, size = 0x4, offset = 0x4, fixed_abs, tag = 'smem constant byte address 0x4 - core index']
  #allocation1 [shape = 'u32[144,128]{1,0:T(1,128)}', space=vmem, size = 0x12000, scoped, tag = 'internal scratch']
  %s0 = inlined_call_operand.hbm [shape: f32[16,128], index: 0, kind: input, shape index: {}]
  %s1 = inlined_call_operand.hbm [shape: f32[768,128], index: 1, kind: input, shape index: {}]
  %s2 = inlined_call_operand.hbm [shape: f32[1,768], index: 2, kind: input, shape index: {}]
  %s3 = inlined_call_operand.hbm [shape: f32[16,768], index: 3, kind: output, shape index: {}]
  %s4 = sld [smem:[#allocation0]]
  $region34: #{tpu_custom_call.1} parent=0
    _
  %s6 = ssub.s32 1, %s4
  %s7 = scalar_select 0, %s6, %s4
  $region1: #{tpu_custom_call.1} parent=0
    #allocation2 [shape = 'u8[8192]{0}', space=vmem, size = 0x2000, scoped, tag = 'input window, operand 0, single buffered']
    #allocation3 [shape = 's32[1]{0}', space=sflag, size = 0x4, scoped, tag = 'scoped memory for tpu_custom_call.1']
    #allocation4 [shape = 's32[1]{0}', space=sflag, size = 0x4, scoped, tag = 'scoped memory for tpu_custom_call.1']
    #allocation5 [shape = 'u8[393216]{0}', space=vmem, size = 0x60000, scoped, tag = 'input window, operand 1, single buffered']
    #allocation6 [shape = 's32[1]{0}', space=sflag, size = 0x4, scoped, tag = 'scoped memory for tpu_custom_call.1']
    #allocation7 [shape = 'u8[3072]{0}', space=vmem, size = 0xc00, scoped, tag = 'input window, operand 2, single buffered']
    #allocation8 [shape = 'u8[49152]{0}', space=vmem, size = 0xc000, scoped, tag = 'output window, operand 0, single buffered']
    %8 = vsyncpa [#allocation3], 0
    %9 = vsyncpa [#allocation6], 0
    %10 = vsyncpa [#allocation4], 0
    // Predicated region
    $region2: #{tpu_custom_call.1} parent=1 // pred_check
      _
    $region3: #{tpu_custom_call.1} parent=1 // pred_check_branch
      %12 = sbr.rel (0) target = $region5
    $region4: #{tpu_custom_call.1} parent=1 // pred_region
      %s14 = ssub.s32 256, 256
      %15 = vsyncadd [#allocation3], %s14
      %s16 = sshll.u32 [#allocation2], 4
      %s17 = int_to_ptr.vmem [resolvable:$true] %s16
      %22 = dma.hbm_to_vmem [thread:$0]  %s0, 256, %s17, [#allocation3], 128, 128, 8
    $region5: #{tpu_custom_call.1} parent=1 // pred_fallthru
      _
    // Predicated region
    $region6: #{tpu_custom_call.1} parent=1 // pred_check
      _
    $region7: #{tpu_custom_call.1} parent=1 // pred_check_branch
      %24 = sbr.rel (0) target = $region9
    $region8: #{tpu_custom_call.1} parent=1 // pred_region
      %s26 = ssub.s32 12288, 12288
      %27 = vsyncadd [#allocation6], %s26
      %s28 = sshll.u32 [#allocation5], 4
      %s29 = int_to_ptr.vmem [resolvable:$true] %s28
      %34 = dma.hbm_to_vmem [thread:$0]  %s1, 12288, %s29, [#allocation6], 128, 128, 8
    $region9: #{tpu_custom_call.1} parent=1 // pred_fallthru
      _
    // Predicated region
    $region10: #{tpu_custom_call.1} parent=1 // pred_check
      _
    $region11: #{tpu_custom_call.1} parent=1 // pred_check_branch
      %36 = sbr.rel (0) target = $region13
    $region12: #{tpu_custom_call.1} parent=1 // pred_region
      %s38 = ssub.s32 96, 96
      %39 = vsyncadd [#allocation6], %s38
      %s41 = sshll.u32 [#allocation7], 4
      %s42 = int_to_ptr.vmem [resolvable:$true] %s41
      %44 = dma.hbm_to_vmem [thread:$0]  %s2, 96, %s42, [#allocation6]
    $region13: #{tpu_custom_call.1} parent=1 // pred_fallthru
      _
    // Predicated region
    $region14: #{tpu_custom_call.1} parent=1 // pred_check
      _
    $region15: #{tpu_custom_call.1} parent=1 // pred_check_branch
      %46 = sbr.rel (0) target = $region17
    $region16: #{tpu_custom_call.1} parent=1 // pred_region
      %47 = dma.done [#allocation3], 256
    $region17: #{tpu_custom_call.1} parent=1 // pred_fallthru
      _
    // Predicated region
    $region18: #{tpu_custom_call.1} parent=1 // pred_check
      _
    $region19: #{tpu_custom_call.1} parent=1 // pred_check_branch
      %49 = sbr.rel (0) target = $region21
    $region20: #{tpu_custom_call.1} parent=1 // pred_region
      %50 = dma.done [#allocation6], 12288
    $region21: #{tpu_custom_call.1} parent=1 // pred_fallthru
      _
    // Predicated region
    $region22: #{tpu_custom_call.1} parent=1 // pred_check
      _
    $region23: #{tpu_custom_call.1} parent=1 // pred_check_branch
      %52 = sbr.rel (0) target = $region25
    $region24: #{tpu_custom_call.1} parent=1 // pred_region
      %53 = dma.done [#allocation6], 96
    $region25: #{tpu_custom_call.1} parent=1 // pred_fallthru
      _
    %v54 = vld [vmem:[#allocation2] sm:$0xff]
    %v55 = vld [vmem:[#allocation2 + $0x8] sm:$0xff]
    %v56 = vld [vmem:[#allocation5] sm:$0xff]
    %v57 = vld [vmem:[#allocation5 + $0x8] sm:$0xff]
    %v58 = vld [vmem:[#allocation5 + $0x10] sm:$0xff]
    %v59 = vld [vmem:[#allocation5 + $0x18] sm:$0xff]
    %v60 = vld [vmem:[#allocation5 + $0x20] sm:$0xff]
    %v61 = vld [vmem:[#allocation5 + $0x28] sm:$0xff]
    %v62 = vld [vmem:[#allocation5 + $0x30] sm:$0xff]
    %v63 = vld [vmem:[#allocation5 + $0x38] sm:$0xff]
    %v64 = vld [vmem:[#allocation5 + $0x40] sm:$0xff]
    %v65 = vld [vmem:[#allocation5 + $0x48] sm:$0xff]
    %v66 = vld [vmem:[#allocation5 + $0x50] sm:$0xff]
    %v67 = vld [vmem:[#allocation5 + $0x58] sm:$0xff]
    %v68 = vld [vmem:[#allocation5 + $0x60] sm:$0xff]
    %v69 = vld [vmem:[#allocation5 + $0x68] sm:$0xff]
    %v70 = vld [vmem:[#allocation5 + $0x70] sm:$0xff]
    %v71 = vld [vmem:[#allocation5 + $0x78] sm:$0xff]
    %v72 = vld [vmem:[#allocation5 + $0x80] sm:$0xff]
    %v73 = vld [vmem:[#allocation5 + $0x88] sm:$0xff]
    %v74 = vld [vmem:[#allocation5 + $0x90] sm:$0xff]
    %v75 = vld [vmem:[#allocation5 + $0x98] sm:$0xff]
    %v76 = vld [vmem:[#allocation5 + $0xa0] sm:$0xff]
    %v77 = vld [vmem:[#allocation5 + $0xa8] sm:$0xff]
    %v78 = vld [vmem:[#allocation5 + $0xb0] sm:$0xff]
    %v79 = vld [vmem:[#allocation5 + $0xb8] sm:$0xff]
    %v80 = vld [vmem:[#allocation5 + $0xc0] sm:$0xff]
    %v81 = vld [vmem:[#allocation5 + $0xc8] sm:$0xff]
    %v82 = vld [vmem:[#allocation5 + $0xd0] sm:$0xff]
    %v83 = vld [vmem:[#allocation5 + $0xd8] sm:$0xff]
    %v84 = vld [vmem:[#allocation5 + $0xe0] sm:$0xff]
    %v85 = vld [vmem:[#allocation5 + $0xe8] sm:$0xff]
    %v86 = vld [vmem:[#allocation5 + $0xf0] sm:$0xff]
    %v87 = vld [vmem:[#allocation5 + $0xf8] sm:$0xff]
    %v88 = vld [vmem:[#allocation5 + $0x100] sm:$0xff]
    %v89 = vld [vmem:[#allocation5 + $0x108] sm:$0xff]
    %v90 = vld [vmem:[#allocation5 + $0x110] sm:$0xff]
    %v91 = vld [vmem:[#allocation5 + $0x118] sm:$0xff]
    %v92 = vld [vmem:[#allocation5 + $0x120] sm:$0xff]
    %v93 = vld [vmem:[#allocation5 + $0x128] sm:$0xff]
    %v94 = vld [vmem:[#allocation5 + $0x130] sm:$0xff]
    %v95 = vld [vmem:[#allocation5 + $0x138] sm:$0xff]
    %v96 = vld [vmem:[#allocation5 + $0x140] sm:$0xff]
    %v97 = vld [vmem:[#allocation5 + $0x148] sm:$0xff]
    %v98 = vld [vmem:[#allocation5 + $0x150] sm:$0xff]
    %v99 = vld [vmem:[#allocation5 + $0x158] sm:$0xff]
    %v100 = vld [vmem:[#allocation5 + $0x160] sm:$0xff]
    %v101 = vld [vmem:[#allocation5 + $0x168] sm:$0xff]
    %v102 = vld [vmem:[#allocation5 + $0x170] sm:$0xff]
    %v103 = vld [vmem:[#allocation5 + $0x178] sm:$0xff]
    %v104 = vld [vmem:[#allocation5 + $0x180] sm:$0xff]
    %v105 = vld [vmem:[#allocation5 + $0x188] sm:$0xff]
    %v106 = vld [vmem:[#allocation5 + $0x190] sm:$0xff]
    %v107 = vld [vmem:[#allocation5 + $0x198] sm:$0xff]
    %v108 = vld [vmem:[#allocation5 + $0x1a0] sm:$0xff]
    %v109 = vld [vmem:[#allocation5 + $0x1a8] sm:$0xff]
    %v110 = vld [vmem:[#allocation5 + $0x1b0] sm:$0xff]
    %v111 = vld [vmem:[#allocation5 + $0x1b8] sm:$0xff]
    %v112 = vld [vmem:[#allocation5 + $0x1c0] sm:$0xff]
    %v113 = vld [vmem:[#allocation5 + $0x1c8] sm:$0xff]
    %v114 = vld [vmem:[#allocation5 + $0x1d0] sm:$0xff]
    %v115 = vld [vmem:[#allocation5 + $0x1d8] sm:$0xff]
    %v116 = vld [vmem:[#allocation5 + $0x1e0] sm:$0xff]
    %v117 = vld [vmem:[#allocation5 + $0x1e8] sm:$0xff]
    %v118 = vld [vmem:[#allocation5 + $0x1f0] sm:$0xff]
    %v119 = vld [vmem:[#allocation5 + $0x1f8] sm:$0xff]
    %v120 = vld [vmem:[#allocation5 + $0x200] sm:$0xff]
    %v121 = vld [vmem:[#allocation5 + $0x208] sm:$0xff]
    %v122 = vld [vmem:[#allocation5 + $0x210] sm:$0xff]
    %v123 = vld [vmem:[#allocation5 + $0x218] sm:$0xff]
    %v124 = vld [vmem:[#allocation5 + $0x220] sm:$0xff]
    %v125 = vld [vmem:[#allocation5 + $0x228] sm:$0xff]
    %v126 = vld [vmem:[#allocation5 + $0x230] sm:$0xff]
    %v127 = vld [vmem:[#allocation5 + $0x238] sm:$0xff]
    %v128 = vld [vmem:[#allocation5 + $0x240] sm:$0xff]
    %v129 = vld [vmem:[#allocation5 + $0x248] sm:$0xff]
    %v130 = vld [vmem:[#allocation5 + $0x250] sm:$0xff]
    %v131 = vld [vmem:[#allocation5 + $0x258] sm:$0xff]
    %v132 = vld [vmem:[#allocation5 + $0x260] sm:$0xff]
    %v133 = vld [vmem:[#allocation5 + $0x268] sm:$0xff]
    %v134 = vld [vmem:[#allocation5 + $0x270] sm:$0xff]
    %v135 = vld [vmem:[#allocation5 + $0x278] sm:$0xff]
    %v136 = vld [vmem:[#allocation5 + $0x280] sm:$0xff]
    %v137 = vld [vmem:[#allocation5 + $0x288] sm:$0xff]
    %v138 = vld [vmem:[#allocation5 + $0x290] sm:$0xff]
    %v139 = vld [vmem:[#allocation5 + $0x298] sm:$0xff]
    %v140 = vld [vmem:[#allocation5 + $0x2a0] sm:$0xff]
    %v141 = vld [vmem:[#allocation5 + $0x2a8] sm:$0xff]
    %v142 = vld [vmem:[#allocation5 + $0x2b0] sm:$0xff]
    %v143 = vld [vmem:[#allocation5 + $0x2b8] sm:$0xff]
    %v144 = vld [vmem:[#allocation5 + $0x2c0] sm:$0xff]
    %v145 = vld [vmem:[#allocation5 + $0x2c8] sm:$0xff]
    %v146 = vld [vmem:[#allocation5 + $0x2d0] sm:$0xff]
    %v147 = vld [vmem:[#allocation5 + $0x2d8] sm:$0xff]
    %v148 = vld [vmem:[#allocation5 + $0x2e0] sm:$0xff]
    %v149 = vld [vmem:[#allocation5 + $0x2e8] sm:$0xff]
    %v150 = vld [vmem:[#allocation5 + $0x2f0] sm:$0xff]
    %v151 = vld [vmem:[#allocation5 + $0x2f8] sm:$0xff]
    %v152 = vld [vmem:[#allocation7] sm:$0x3f]
    %v154 = vlaneseq
    %v155 = vshrl.u32 %v154, 7
    %v156 = vsub.s32 0, %v155
    %v157 = vrot.slane %v152, %v156
    %v158 = vlaneseq
    %v159 = vshrl.u32 %v158, 7
    %v160 = vsub.s32 1, %v159
    %v161 = vrot.slane %v152, %v160
    %v162 = vlaneseq
    %v163 = vshrl.u32 %v162, 7
    %v164 = vsub.s32 2, %v163
    %v165 = vrot.slane %v152, %v164
    %v166 = vlaneseq
    %v167 = vshrl.u32 %v166, 7
    %v168 = vsub.s32 3, %v167
    %v169 = vrot.slane %v152, %v168
    %v170 = vlaneseq
    %v171 = vshrl.u32 %v170, 7
    %v172 = vsub.s32 4, %v171
    %v173 = vrot.slane %v152, %v172
    %v174 = vlaneseq
    %v175 = vshrl.u32 %v174, 7
    %v176 = vsub.s32 5, %v175
    %v177 = vrot.slane %v152, %v176
    %184 = vmatprep.subr.mxu0 0.0
    %185 = vmatpush1.xpose.msra.mxu0 %v71
    %186 = vmatprep.subr.mxu0 0.0
    %187 = vmatpush1.xpose.msra.mxu0 %v70
    %188 = vmatprep.subr.mxu0 0.0
    %189 = vmatpush1.xpose.msra.mxu0 %v69
    %190 = vmatprep.subr.mxu0 0.0
    %191 = vmatpush1.xpose.msra.mxu0 %v68
    %192 = vmatprep.subr.mxu0 0.0
    %193 = vmatpush1.xpose.msra.mxu0 %v67
    %194 = vmatprep.subr.mxu0 0.0
    %195 = vmatpush1.xpose.msra.mxu0 %v66
    %196 = vmatprep.subr.mxu0 0.0
    %197 = vmatpush1.xpose.msra.mxu0 %v65
    %198 = vmatprep.subr.mxu0 0.0
    %199 = vmatpush1.xpose.msra.mxu0 %v64
    %200 = vmatprep.subr.mxu0 0.0
    %201 = vmatpush1.xpose.msra.mxu0 %v63
    %202 = vmatprep.subr.mxu0 0.0
    %203 = vmatpush1.xpose.msra.mxu0 %v62
    %204 = vmatprep.subr.mxu0 0.0
    %205 = vmatpush1.xpose.msra.mxu0 %v61
    %206 = vmatprep.subr.mxu0 0.0
    %207 = vmatpush1.xpose.msra.mxu0 %v60
    %208 = vmatprep.subr.mxu0 0.0
    %209 = vmatpush1.xpose.msra.mxu0 %v59
    %210 = vmatprep.subr.mxu0 0.0
    %211 = vmatpush1.xpose.msra.mxu0 %v58
    %212 = vmatprep.subr.mxu0 0.0
    %213 = vmatpush1.xpose.msra.mxu0 %v57
    %214 = vmatprep.subr.mxu0 0.0
    %215 = vmatpush1.xpose.msra.mxu0 %v56
    %216 = vmatprep.subr.mxu0 0.0
    %217 = vmatpush2.xpose.msra.mxu0 %v87
    %218 = vmatprep.subr.mxu0 0.0
    %219 = vmatpush2.xpose.msra.mxu0 %v86
    %220 = vmatprep.subr.mxu0 0.0
    %221 = vmatpush2.xpose.msra.mxu0 %v85
    %222 = vmatprep.subr.mxu0 0.0
    %223 = vmatpush2.xpose.msra.mxu0 %v84
    %224 = vmatprep.subr.mxu0 0.0
    %225 = vmatpush2.xpose.msra.mxu0 %v83
    %226 = vmatprep.subr.mxu0 0.0
    %227 = vmatpush2.xpose.msra.mxu0 %v82
    %228 = vmatprep.subr.mxu0 0.0
    %229 = vmatpush2.xpose.msra.mxu0 %v81
    %230 = vmatprep.subr.mxu0 0.0
    %231 = vmatpush2.xpose.msra.mxu0 %v80
    %232 = vmatprep.subr.mxu0 0.0
    %233 = vmatpush2.xpose.msra.mxu0 %v79
    %234 = vmatprep.subr.mxu0 0.0
    %235 = vmatpush2.xpose.msra.mxu0 %v78
    %236 = vmatprep.subr.mxu0 0.0
    %237 = vmatpush2.xpose.msra.mxu0 %v77
    %238 = vmatprep.subr.mxu0 0.0
    %239 = vmatpush2.xpose.msra.mxu0 %v76
    %240 = vmatprep.subr.mxu0 0.0
    %241 = vmatpush2.xpose.msra.mxu0 %v75
    %242 = vmatprep.subr.mxu0 0.0
    %243 = vmatpush2.xpose.msra.mxu0 %v74
    %244 = vmatprep.subr.mxu0 0.0
    %245 = vmatpush2.xpose.msra.mxu0 %v73
    %246 = vmatprep.subr.mxu0 0.0
    %247 = vmatpush2.xpose.msra.mxu0 %v72
    %248 = vmatprep.mubr.f32.mxu0 0.0
    %249 = vmatmul.mubr.f32.gmra.mxu0 %v54
    %v250 = vpop.f32.mrf.mxu0
    %v251 = vadd.f32 %v157, %v250
    %v252 = vpop.f32.mrf.mxu0
    %v253 = vadd.f32 %v161, %v252
    %254 = vmatprep.mubr.f32.mxu0 0.0
    %255 = vmatmul.mubr.f32.gmra.mxu0 %v55
    %v256 = vpop.f32.mrf.mxu0
    %v257 = vadd.f32 %v157, %v256
    %v258 = vpop.f32.mrf.mxu0
    %v259 = vadd.f32 %v161, %v258
    %260 = vdwg.mxu0
    %261 = vmatprep.subr.mxu0 0.0
    %262 = vmatpush1.xpose.msra.mxu0 %v103
    %263 = vmatprep.subr.mxu0 0.0
    %264 = vmatpush1.xpose.msra.mxu0 %v102
    %265 = vmatprep.subr.mxu0 0.0
    %266 = vmatpush1.xpose.msra.mxu0 %v101
    %267 = vmatprep.subr.mxu0 0.0
    %268 = vmatpush1.xpose.msra.mxu0 %v100
    %269 = vmatprep.subr.mxu0 0.0
    %270 = vmatpush1.xpose.msra.mxu0 %v99
    %271 = vmatprep.subr.mxu0 0.0
    %272 = vmatpush1.xpose.msra.mxu0 %v98
    %273 = vmatprep.subr.mxu0 0.0
    %274 = vmatpush1.xpose.msra.mxu0 %v97
    %275 = vmatprep.subr.mxu0 0.0
    %276 = vmatpush1.xpose.msra.mxu0 %v96
    %277 = vmatprep.subr.mxu0 0.0
    %278 = vmatpush1.xpose.msra.mxu0 %v95
    %279 = vmatprep.subr.mxu0 0.0
    %280 = vmatpush1.xpose.msra.mxu0 %v94
    %281 = vmatprep.subr.mxu0 0.0
    %282 = vmatpush1.xpose.msra.mxu0 %v93
    %283 = vmatprep.subr.mxu0 0.0
    %284 = vmatpush1.xpose.msra.mxu0 %v92
    %285 = vmatprep.subr.mxu0 0.0
    %286 = vmatpush1.xpose.msra.mxu0 %v91
    %287 = vmatprep.subr.mxu0 0.0
    %288 = vmatpush1.xpose.msra.mxu0 %v90
    %289 = vmatprep.subr.mxu0 0.0
    %290 = vmatpush1.xpose.msra.mxu0 %v89
    %291 = vmatprep.subr.mxu0 0.0
    %292 = vmatpush1.xpose.msra.mxu0 %v88
    %293 = vmatprep.subr.mxu0 0.0
    %294 = vmatpush2.xpose.msra.mxu0 %v119
    %295 = vmatprep.subr.mxu0 0.0
    %296 = vmatpush2.xpose.msra.mxu0 %v118
    %297 = vmatprep.subr.mxu0 0.0
    %298 = vmatpush2.xpose.msra.mxu0 %v117
    %299 = vmatprep.subr.mxu0 0.0
    %300 = vmatpush2.xpose.msra.mxu0 %v116
    %301 = vmatprep.subr.mxu0 0.0
    %302 = vmatpush2.xpose.msra.mxu0 %v115
    %303 = vmatprep.subr.mxu0 0.0
    %304 = vmatpush2.xpose.msra.mxu0 %v114
    %305 = vmatprep.subr.mxu0 0.0
    %306 = vmatpush2.xpose.msra.mxu0 %v113
    %307 = vmatprep.subr.mxu0 0.0
    %308 = vmatpush2.xpose.msra.mxu0 %v112
    %309 = vmatprep.subr.mxu0 0.0
    %310 = vmatpush2.xpose.msra.mxu0 %v111
    %311 = vmatprep.subr.mxu0 0.0
    %312 = vmatpush2.xpose.msra.mxu0 %v110
    %313 = vmatprep.subr.mxu0 0.0
    %314 = vmatpush2.xpose.msra.mxu0 %v109
    %315 = vmatprep.subr.mxu0 0.0
    %316 = vmatpush2.xpose.msra.mxu0 %v108
    %317 = vmatprep.subr.mxu0 0.0
    %318 = vmatpush2.xpose.msra.mxu0 %v107
    %319 = vmatprep.subr.mxu0 0.0
    %320 = vmatpush2.xpose.msra.mxu0 %v106
    %321 = vmatprep.subr.mxu0 0.0
    %322 = vmatpush2.xpose.msra.mxu0 %v105
    %323 = vmatprep.subr.mxu0 0.0
    %324 = vmatpush2.xpose.msra.mxu0 %v104
    %325 = vmatprep.mubr.f32.mxu0 0.0
    %326 = vmatmul.mubr.f32.gmra.mxu0 %v54
    %v327 = vpop.f32.mrf.mxu0
    %v328 = vadd.f32 %v165, %v327
    %v329 = vpop.f32.mrf.mxu0
    %v330 = vadd.f32 %v169, %v329
    %331 = vmatprep.mubr.f32.mxu0 0.0
    %332 = vmatmul.mubr.f32.gmra.mxu0 %v55
    %v333 = vpop.f32.mrf.mxu0
    %v334 = vadd.f32 %v165, %v333
    %v335 = vpop.f32.mrf.mxu0
    %v336 = vadd.f32 %v169, %v335
    %337 = vdwg.mxu0
    %338 = vmatprep.subr.mxu0 0.0
    %339 = vmatpush1.xpose.msra.mxu0 %v135
    %340 = vmatprep.subr.mxu0 0.0
    %341 = vmatpush1.xpose.msra.mxu0 %v134
    %342 = vmatprep.subr.mxu0 0.0
    %343 = vmatpush1.xpose.msra.mxu0 %v133
    %344 = vmatprep.subr.mxu0 0.0
    %345 = vmatpush1.xpose.msra.mxu0 %v132
    %346 = vmatprep.subr.mxu0 0.0
    %347 = vmatpush1.xpose.msra.mxu0 %v131
    %348 = vmatprep.subr.mxu0 0.0
    %349 = vmatpush1.xpose.msra.mxu0 %v130
    %350 = vmatprep.subr.mxu0 0.0
    %351 = vmatpush1.xpose.msra.mxu0 %v129
    %352 = vmatprep.subr.mxu0 0.0
    %353 = vmatpush1.xpose.msra.mxu0 %v128
    %354 = vmatprep.subr.mxu0 0.0
    %355 = vmatpush1.xpose.msra.mxu0 %v127
    %356 = vmatprep.subr.mxu0 0.0
    %357 = vmatpush1.xpose.msra.mxu0 %v126
    %358 = vmatprep.subr.mxu0 0.0
    %359 = vmatpush1.xpose.msra.mxu0 %v125
    %360 = vmatprep.subr.mxu0 0.0
    %361 = vmatpush1.xpose.msra.mxu0 %v124
    %362 = vmatprep.subr.mxu0 0.0
    %363 = vmatpush1.xpose.msra.mxu0 %v123
    %364 = vmatprep.subr.mxu0 0.0
    %365 = vmatpush1.xpose.msra.mxu0 %v122
    %366 = vmatprep.subr.mxu0 0.0
    %367 = vmatpush1.xpose.msra.mxu0 %v121
    %368 = vmatprep.subr.mxu0 0.0
    %369 = vmatpush1.xpose.msra.mxu0 %v120
    %370 = vmatprep.subr.mxu0 0.0
    %371 = vmatpush2.xpose.msra.mxu0 %v151
    %372 = vmatprep.subr.mxu0 0.0
    %373 = vmatpush2.xpose.msra.mxu0 %v150
    %374 = vmatprep.subr.mxu0 0.0
    %375 = vmatpush2.xpose.msra.mxu0 %v149
    %376 = vmatprep.subr.mxu0 0.0
    %377 = vmatpush2.xpose.msra.mxu0 %v148
    %378 = vmatprep.subr.mxu0 0.0
    %379 = vmatpush2.xpose.msra.mxu0 %v147
    %380 = vmatprep.subr.mxu0 0.0
    %381 = vmatpush2.xpose.msra.mxu0 %v146
    %382 = vmatprep.subr.mxu0 0.0
    %383 = vmatpush2.xpose.msra.mxu0 %v145
    %384 = vmatprep.subr.mxu0 0.0
    %385 = vmatpush2.xpose.msra.mxu0 %v144
    %386 = vmatprep.subr.mxu0 0.0
    %387 = vmatpush2.xpose.msra.mxu0 %v143
    %388 = vmatprep.subr.mxu0 0.0
    %389 = vmatpush2.xpose.msra.mxu0 %v142
    %390 = vmatprep.subr.mxu0 0.0
    %391 = vmatpush2.xpose.msra.mxu0 %v141
    %392 = vmatprep.subr.mxu0 0.0
    %393 = vmatpush2.xpose.msra.mxu0 %v140
    %394 = vmatprep.subr.mxu0 0.0
    %395 = vmatpush2.xpose.msra.mxu0 %v139
    %396 = vmatprep.subr.mxu0 0.0
    %397 = vmatpush2.xpose.msra.mxu0 %v138
    %398 = vmatprep.subr.mxu0 0.0
    %399 = vmatpush2.xpose.msra.mxu0 %v137
    %400 = vmatprep.subr.mxu0 0.0
    %401 = vmatpush2.xpose.msra.mxu0 %v136
    %402 = vmatprep.mubr.f32.mxu0 0.0
    %403 = vmatmul.mubr.f32.gmra.mxu0 %v54
    %v404 = vpop.f32.mrf.mxu0
    %v405 = vadd.f32 %v173, %v404
    %v406 = vpop.f32.mrf.mxu0
    %v407 = vadd.f32 %v177, %v406
    %408 = vmatprep.mubr.f32.mxu0 0.0
    %409 = vmatmul.mubr.f32.gmra.mxu0 %v55
    %v410 = vpop.f32.mrf.mxu0
    %v411 = vadd.f32 %v173, %v410
    %v412 = vpop.f32.mrf.mxu0
    %v413 = vadd.f32 %v177, %v412
    %414 = vdwg.mxu0
    %415 = vst [vmem:[#allocation8] sm:$0xff] %v251
    %416 = vst [vmem:[#allocation8 + $0x8] sm:$0xff] %v253
    %417 = vst [vmem:[#allocation8 + $0x10] sm:$0xff] %v328
    %418 = vst [vmem:[#allocation8 + $0x18] sm:$0xff] %v330
    %419 = vst [vmem:[#allocation8 + $0x20] sm:$0xff] %v405
    %420 = vst [vmem:[#allocation8 + $0x28] sm:$0xff] %v407
    %421 = vst [vmem:[#allocation8 + $0x30] sm:$0xff] %v257
    %422 = vst [vmem:[#allocation8 + $0x38] sm:$0xff] %v259
    %423 = vst [vmem:[#allocation8 + $0x40] sm:$0xff] %v334
    %424 = vst [vmem:[#allocation8 + $0x48] sm:$0xff] %v336
    %425 = vst [vmem:[#allocation8 + $0x50] sm:$0xff] %v411
    %426 = vst [vmem:[#allocation8 + $0x58] sm:$0xff] %v413
    // Predicated region
    $region26: #{tpu_custom_call.1} parent=1 // pred_check
      _
    $region27: #{tpu_custom_call.1} parent=1 // pred_check_branch
      %428 = sbr.rel (0) target = $region29
    $region28: #{tpu_custom_call.1} parent=1 // pred_region
      %s430 = ssub.s32 1536, 1536
      %431 = vsyncadd [#allocation4], %s430
      %s432 = sshll.u32 [#allocation8], 4
      %s433 = int_to_ptr.vmem [resolvable:$true] %s432
      %438 = dma.vmem_to_hbm [thread:$0]  %s433, 1536, %s3, [#allocation4], 768, 768, 48
    $region29: #{tpu_custom_call.1} parent=1 // pred_fallthru
      _
    // Predicated region
    $region30: #{tpu_custom_call.1} parent=1 // pred_check
      _
    $region31: #{tpu_custom_call.1} parent=1 // pred_check_branch
      %440 = sbr.rel (0) target = $region33
    $region32: #{tpu_custom_call.1} parent=1 // pred_region
      %441 = dma.done [#allocation4], 1536
    $region33: #{tpu_custom_call.1} parent=1 // pred_fallthru
      _
    %442 = vsyncpa [#allocation3], 1
    %443 = vsyncpa [#allocation6], 1
    %444 = vsyncpa [#allocation4], 1

</llo_original>
